<compile_context>
chip_gen: v6e
topology: v6e:2x2x1
jax: 0.10.0
libtpu: 0.0.40
codegen_flags: <defaults>
</compile_context>

<pallas_src>
import math

import jax
import jax.numpy as jnp
from jax.experimental import pallas as pl
from jax.experimental.pallas import tpu as pltpu


def _cls_token_kernel(x_ref, w_ref, o_ref):
    # x_ref: (TB, S*D)       flattened token rows for TB batch items
    # w_ref: (1, D)          the CLS weight vector
    # o_ref: (TB, (S+1)*D)   flattened output rows
    tb, sd = x_ref.shape
    d = w_ref.shape[1]
    # Copy the original tokens: one large, lane-dense store.
    o_ref[:, pl.ds(0, sd)] = x_ref[...]
    # Append the CLS token at the end of every row: one small slab store.
    o_ref[:, pl.ds(sd, d)] = jnp.broadcast_to(w_ref[...], (tb, d))


def _pick_batch_tile(batch: int, out_row_bytes: int) -> int:
    """Rows per grid step: big tiles for HBM efficiency, VMEM-safe on v5e/v6e/v7x."""
    tile_cap_bytes = 4 * 1024 * 1024  # per tile; double-buffered in+out stays <= ~18 MiB
    tb = max(1, tile_cap_bytes // max(1, out_row_bytes))
    if batch >= 2:
        # Keep at least 2 grid steps so v7x can split the batch over its 2 TensorCores.
        tb = min(tb, pl.cdiv(batch, 2))
    tb = min(tb, batch)
    if tb < batch:
        # (8,128) rule: a blocked sublane dim must be a multiple of 8 (or the full dim).
        tb = (tb // 8) * 8
        if tb < 8:
            tb = batch  # problem too small to split at sublane granularity
    return tb


def cls_token_forward(x: jax.Array, weight: jax.Array) -> jax.Array:
    """Append the CLS token to the end of each sequence. x: [B,S,D], weight: [D]."""
    B, S, D = x.shape
    itemsize = jnp.dtype(x.dtype).itemsize
    sd_in, sd_out = S * D, (S + 1) * D

    # NOTE: weight is cast to x.dtype (a bf16 x truncates an f32-trained CLS vector).
    w2d = weight.astype(x.dtype).reshape(1, D)
    # Free (metadata-only) reshapes: present lane-dense 2-D views to the kernel.
    x2d = x.reshape(B, sd_in)

    tb = _pick_batch_tile(B, sd_out * itemsize)
    grid = (pl.cdiv(B, tb),)

    bytes_accessed = (B * sd_in + B * sd_out + D) * itemsize

    out2d = pl.pallas_call(
        _cls_token_kernel,
        out_shape=jax.ShapeDtypeStruct((B, sd_out), x.dtype),
        grid_spec=pltpu.PrefetchScalarGridSpec(
            num_scalar_prefetch=0,
            grid=grid,
            in_specs=[
                pl.BlockSpec((tb, sd_in), lambda i: (i, 0)),
                pl.BlockSpec((1, D), lambda i: (0, 0)),
            ],
            out_specs=pl.BlockSpec((tb, sd_out), lambda i: (i, 0)),
        ),
        compiler_params=pltpu.CompilerParams(
            dimension_semantics=("parallel",),
            vmem_limit_bytes=32 * 1024 * 1024,
        ),
        cost_estimate=pl.CostEstimate(
            flops=0, transcendentals=0, bytes_accessed=int(bytes_accessed)
        ),
    )(x2d, w2d)
    return out2d.reshape(B, S + 1, D)


def init_cls_weight(key: jax.Array, d_token: int, initialization: str = "uniform") -> jax.Array:
    """Deterministic equivalent of _TokenInitialization.apply."""
    s = 1.0 / math.sqrt(d_token)
    if initialization == "uniform":
        return jax.random.uniform(key, (d_token,), jnp.float32, minval=-s, maxval=s)
    elif initialization == "normal":
        return jax.random.normal(key, (d_token,), jnp.float32) * s
    raise ValueError("initialization must be one of ['uniform', 'normal']")


if __name__ == "__main__":
    key = jax.random.PRNGKey(0)
    kx, kw = jax.random.split(key)

    B, S, D = 2, 8, 32  # (batch, n_tokens, d_token)
    x = jax.random.normal(kx, (B, S, D), jnp.float32)
    weight = init_cls_weight(kw, D, "uniform")

    out = jax.block_until_ready(cls_token_forward(x, weight))

    # Reference: torch.cat([x, weight.expand(B, 1, D)], dim=1)
    ref = jnp.concatenate(
        [x, jnp.broadcast_to(weight.reshape(1, 1, D), (B, 1, D))], axis=1
    )
    assert out.shape == (B, S + 1, D)
    assert jnp.allclose(out, ref), "mismatch vs reference"
    print("KERNEL_OK")
</pallas_src>

<mosaic_0001>
module attributes {stable_mosaic.version = 11 : i64} {
  func.func @_cls_token_kernel(%arg0: i32, %arg1: memref<2x256xf32, #tpu.memory_space<vmem>>, %arg2: memref<1x32xf32, #tpu.memory_space<vmem>>, %arg3: memref<2x288xf32, #tpu.memory_space<vmem>>) attributes {dimension_semantics = [#tpu.dimension_semantics<parallel>], iteration_bounds = array<i64: 1>, scalar_prefetch = 0 : i64, scratch_operands = 0 : i64, tpu.core_type = #tpu.core_type<tc>, window_params = [{transform_indices = @transform_0, window_bounds = array<i64: 2, 256>}, {pipeline_mode = #tpu.pipeline_mode<synchronous>, transform_indices = @transform_1, window_bounds = array<i64: 1, 32>}, {transform_indices = @transform_2, window_bounds = array<i64: 2, 288>}]} {
    %c0 = arith.constant 0 : index
    %c0_0 = arith.constant 0 : index
    %0 = vector.load %arg1[%c0, %c0_0] : memref<2x256xf32, #tpu.memory_space<vmem>>, vector<2x256xf32>
    %c0_1 = arith.constant 0 : index
    %c0_2 = arith.constant 0 : index
    %1 = vector.load %arg3[%c0_1, %c0_2] : memref<2x288xf32, #tpu.memory_space<vmem>>, vector<2x256xf32>
    tpu.vector_store %arg3[%c0_1, %c0_2], %0 {strides = array<i32>} : memref<2x288xf32, #tpu.memory_space<vmem>>, vector<2x256xf32>,
    %c0_3 = arith.constant 0 : index
    %c0_4 = arith.constant 0 : index
    %2 = vector.load %arg2[%c0_3, %c0_4] : memref<1x32xf32, #tpu.memory_space<vmem>>, vector<1x32xf32>
    %3 = vector.shape_cast %2 : vector<1x32xf32> to vector<1x32xf32>
    %4 = vector.broadcast %3 : vector<1x32xf32> to vector<2x32xf32>
    %c0_5 = arith.constant 0 : index
    %c256 = arith.constant 256 : index
    %5 = vector.load %arg3[%c0_5, %c256] : memref<2x288xf32, #tpu.memory_space<vmem>>, vector<2x32xf32>
    tpu.vector_store %arg3[%c0_5, %c256], %4 {strides = array<i32>} : memref<2x288xf32, #tpu.memory_space<vmem>>, vector<2x32xf32>,
    return
  }
  func.func @transform_0(%arg0: i32) -> (i32, i32) {
    %c0_i32 = arith.constant 0 : i32
    %c0_i32_0 = arith.constant 0 : i32
    return %arg0, %c0_i32 : i32, i32
  }
  func.func @transform_1(%arg0: i32) -> (i32, i32) {
    %c0_i32 = arith.constant 0 : i32
    %c0_i32_0 = arith.constant 0 : i32
    %c0_i32_1 = arith.constant 0 : i32
    return %c0_i32, %c0_i32_0 : i32, i32
  }
  func.func @transform_2(%arg0: i32) -> (i32, i32) {
    %c0_i32 = arith.constant 0 : i32
    %c0_i32_0 = arith.constant 0 : i32
    return %arg0, %c0_i32 : i32, i32
  }
}

</mosaic_0001>

<llo_original>
// kernel: tpu_custom_call.1
$region0: #{tpu_custom_call.1}
  #allocation0 [shape = 'u32[]', space=smem, size = 0x4, offset = 0x4, fixed_abs, tag = 'smem constant byte address 0x4 - core index']
  #allocation1 [shape = 'u32[144,128]{1,0:T(1,128)}', space=vmem, size = 0x12000, scoped, tag = 'internal scratch']
  %s0 = inlined_call_operand.hbm [shape: f32[2,256], index: 0, kind: input, shape index: {}]
  %s1 = inlined_call_operand.vmem [shape: f32[1,32], index: 1, kind: input, shape index: {}]
  %s2 = inlined_call_operand.hbm [shape: f32[2,288], index: 2, kind: output, shape index: {}]
  %s3 = sld [smem:[#allocation0]]
  $region22: #{tpu_custom_call.1} parent=0
    _
  %s5 = ssub.s32 1, %s3
  %s6 = scalar_select 0, %s5, %s3
  $region1: #{tpu_custom_call.1} parent=0
    #allocation2 [shape = 'u8[2048]{0}', space=vmem, size = 0x800, scoped, tag = 'input window, operand 0, single buffered']
    #allocation3 [shape = 's32[1]{0}', space=sflag, size = 0x4, scoped, tag = 'scoped memory for tpu_custom_call.1']
    #allocation4 [shape = 's32[1]{0}', space=sflag, size = 0x4, scoped, tag = 'scoped memory for tpu_custom_call.1']
    #allocation5 [shape = 'u8[3072]{0}', space=vmem, size = 0xc00, scoped, tag = 'output window, operand 0, single buffered']
    %7 = vsyncpa [#allocation3], 0
    %8 = vsyncpa [#allocation4], 0
    // Predicated region
    $region2: #{tpu_custom_call.1} parent=1 // pred_check
      _
    $region3: #{tpu_custom_call.1} parent=1 // pred_check_branch
      %10 = sbr.rel (0) target = $region5
    $region4: #{tpu_custom_call.1} parent=1 // pred_region
      %s12 = ssub.s32 64, 64
      %13 = vsyncadd [#allocation3], %s12
      %s15 = sshll.u32 [#allocation2], 4
      %s16 = int_to_ptr.vmem [resolvable:$true] %s15
      %18 = dma.hbm_to_vmem [thread:$0]  %s0, 64, %s16, [#allocation3]
    $region5: #{tpu_custom_call.1} parent=1 // pred_fallthru
      _
    // Predicated region
    $region6: #{tpu_custom_call.1} parent=1 // pred_check
      _
    $region7: #{tpu_custom_call.1} parent=1 // pred_check_branch
      %20 = sbr.rel (0) target = $region9
    $region8: #{tpu_custom_call.1} parent=1 // pred_region
      _
    $region9: #{tpu_custom_call.1} parent=1 // pred_fallthru
      _
    // Predicated region
    $region10: #{tpu_custom_call.1} parent=1 // pred_check
      _
    $region11: #{tpu_custom_call.1} parent=1 // pred_check_branch
      %22 = sbr.rel (0) target = $region13
    $region12: #{tpu_custom_call.1} parent=1 // pred_region
      %23 = dma.done [#allocation3], 64
    $region13: #{tpu_custom_call.1} parent=1 // pred_fallthru
      _
    %v24 = vld [vmem:[#allocation2] sm:$0xf]
    %25 = vst [vmem:[#allocation5] sm:$0xf] %v24
    %v26 = vld [vmem:[%s1] sm:$0x1]
    %v28 = vlaneseq
    %v29 = vshrl.u32 %v28, 7
    %v30 = vsub.s32 0, %v29
    %v31 = vrot.slane %v26, %v30
    %vm33 = vcmask 254976
    %34 = vst.msk [vmem:[#allocation5 + $0x4] sm:$0x3] %vm33, %v31
    // Predicated region
    $region14: #{tpu_custom_call.1} parent=1 // pred_check
      _
    $region15: #{tpu_custom_call.1} parent=1 // pred_check_branch
      %36 = sbr.rel (0) target = $region17
    $region16: #{tpu_custom_call.1} parent=1 // pred_region
      %s38 = ssub.s32 96, 96
      %39 = vsyncadd [#allocation4], %s38
      %s41 = sshll.u32 [#allocation5], 4
      %s42 = int_to_ptr.vmem [resolvable:$true] %s41
      %44 = dma.vmem_to_hbm [thread:$0]  %s42, 96, %s2, [#allocation4]
    $region17: #{tpu_custom_call.1} parent=1 // pred_fallthru
      _
    // Predicated region
    $region18: #{tpu_custom_call.1} parent=1 // pred_check
      _
    $region19: #{tpu_custom_call.1} parent=1 // pred_check_branch
      %46 = sbr.rel (0) target = $region21
    $region20: #{tpu_custom_call.1} parent=1 // pred_region
      %47 = dma.done [#allocation4], 96
    $region21: #{tpu_custom_call.1} parent=1 // pred_fallthru
      _
    %48 = vsyncpa [#allocation3], 1
    %49 = vsyncpa [#allocation4], 1

</llo_original>
